<compile_context>
chip_gen: v7x
topology: tpu7x:2x2x1
jax: 0.10.0
libtpu: 0.0.40
codegen_flags: <defaults>
</compile_context>

<pallas_src>
import jax
import jax.numpy as jnp
from jax.experimental import pallas as pl
from jax.experimental.pallas import tpu as pltpu


def _noise_injection_kernel(addend_ref, scale_ref, fm_ref, out_ref):
    # addend_ref: (TR, 1)   f32   per-row additive scalar tn[b, c]
    # scale_ref:  (1, TC)   f32   exp(weight) laid out along the flattened H*W axis
    # fm_ref:     (TR, TC)        feature-map tile
    # out_ref:    (TR, TC)
    fm = fm_ref[...]
    out = fm.astype(jnp.float32) + addend_ref[...] * scale_ref[...]
    out_ref[...] = out.astype(out_ref.dtype)


def _ceil_div(a, b):
    return -(-a // b)


def _num_tensorcores():
    """2 for v7x-class chips (2 TCs/chip), else 1 (v5e / v6e)."""
    try:
        kind = jax.devices()[0].device_kind.lower()
        if "v7" in kind:
            return 2
    except Exception:
        pass
    return 1


def noise_injection(feature_map, noise, linear_w, linear_b, weight,
                    *, donate_feature_map=False):
    """feature_map: (B, C, H, W)   noise: (B, noise_dim)
       linear_w: (C, noise_dim)    linear_b: (C,)   weight: (C,)"""
    B, C, H, W = feature_map.shape
    assert W == C, "PyTorch right-aligned broadcast in this module requires W == C"

    f32 = jnp.float32
    # ---- hoisted small compute (tiny matmul + exp don't belong in the body) ----
    tn = noise.astype(f32) @ linear_w.astype(f32).T + linear_b.astype(f32)   # (B, C)
    scale = jnp.exp(weight.astype(f32))                                      # (C,) == (W,)

    HW = H * W
    R = B * C
    fm2d = feature_map.reshape(R, HW)            # lane-dense flattened layout, NO padding
    addend = tn.reshape(R, 1)
    scale_row = jnp.tile(scale, H).reshape(1, HW)  # exp(weight)[w] at flat index h*W + w

    itemsize = jnp.dtype(feature_map.dtype).itemsize
    sub = 8 * max(1, 4 // itemsize)              # sublane pack: 8 f32, 16 bf16, 32 int8/fp8
    two_tc = _num_tensorcores() >= 2
    cap = (4 << 20) if two_tc else (8 << 20)     # per-tile byte budget (v7x: only 64 MiB VMEM)

    # ---- tile selection -------------------------------------------------------
    min_rows = min(R, sub)
    col_tiled = min_rows * HW * itemsize > cap   # rows too wide -> 2-D (row, col) grid
    if col_tiled:
        tr = min_rows
        tc = max(128, ((cap // (tr * itemsize)) // 128) * 128)
        tc = min(tc, max(128, (HW // 128) * 128))
    else:
        tc = HW
        row_bytes = HW * itemsize
        max_rows = max(sub, ((cap // row_bytes) // sub) * sub)
        if R <= sub:
            tr = R
        else:
            tr = min((R // sub) * sub, max_rows)
            if two_tc:
                # aim for an even number of grid steps so both TensorCores get equal work
                steps = _ceil_div(R, tr)
                if steps < 2 or steps % 2:
                    target = max(2, steps + (steps % 2))
                    tr_new = _ceil_div(_ceil_div(R, target), sub) * sub
                    tr = max(sub, min(tr, tr_new))

    grid_r = _ceil_div(R, tr)
    if col_tiled:
        grid_c = _ceil_div(HW, tc)
        grid = (grid_r, grid_c)
        in_specs = [
            pl.BlockSpec((tr, 1), lambda i, j: (i, 0)),    # per-row addend
            pl.BlockSpec((1, tc), lambda i, j: (0, j)),    # tiled exp(weight)
            pl.BlockSpec((tr, tc), lambda i, j: (i, j)),   # feature-map tile
        ]
        out_specs = pl.BlockSpec((tr, tc), lambda i, j: (i, j))
        dims = ("parallel", "parallel")
    else:
        grid = (grid_r,)
        in_specs = [
            pl.BlockSpec((tr, 1), lambda i: (i, 0)),       # per-row addend
            pl.BlockSpec((1, HW), lambda i: (0, 0)),       # tiled exp(weight)
            pl.BlockSpec((tr, HW), lambda i: (i, 0)),      # feature-map rows
        ]
        out_specs = pl.BlockSpec((tr, HW), lambda i: (i, 0))
        dims = ("parallel",)

    # Explicit VMEM budget: double-buffered fm-in + out tiles plus small operands + slack.
    tile_bytes = tr * tc * itemsize
    need = 4 * tile_bytes + 2 * 4 * (tr + tc) + (4 << 20)
    vmem_limit = int(min(max(need, 24 << 20), 48 << 20))

    kwargs = {}
    if donate_feature_map:
        kwargs["input_output_aliases"] = {2: 0}   # fm2d aliases the output buffer

    out2d = pl.pallas_call(
        _noise_injection_kernel,
        out_shape=jax.ShapeDtypeStruct((R, HW), feature_map.dtype),
        grid_spec=pltpu.PrefetchScalarGridSpec(
            num_scalar_prefetch=0,
            grid=grid,
            in_specs=in_specs,
            out_specs=out_specs,
        ),
        compiler_params=pltpu.CompilerParams(
            dimension_semantics=dims,
            vmem_limit_bytes=vmem_limit),
        **kwargs,
    )(addend, scale_row, fm2d)

    return out2d.reshape(B, C, H, W)


def noise_injection_ref(feature_map, noise, linear_w, linear_b, weight):
    tn = noise @ linear_w.T + linear_b                 # (B, C)
    tn = tn[:, :, None, None]                          # (B, C, 1, 1)
    return feature_map + tn * jnp.exp(weight)          # exp(weight) hits last (W) axis


if __name__ == "__main__":
    key = jax.random.PRNGKey(0)
    k1, k2, k3, k4, k5 = jax.random.split(key, 5)

    B, C, H, W = 2, 16, 8, 16        # W must equal C (module's broadcast)
    noise_dim = 8

    feature_map = jax.random.normal(k1, (B, C, H, W), dtype=jnp.float32)
    noise = jax.random.normal(k2, (B, noise_dim), dtype=jnp.float32)

    # Parameter shapes per nn.Linear(noise_dim, C) and nn.Parameter(ones(C)).
    linear_w = 0.1 * jax.random.normal(k3, (C, noise_dim), dtype=jnp.float32)
    linear_b = 0.1 * jax.random.normal(k4, (C,), dtype=jnp.float32)
    weight = 0.05 * jax.random.normal(k5, (C,), dtype=jnp.float32)

    out = noise_injection(feature_map, noise, linear_w, linear_b, weight)
    out = jax.block_until_ready(out)

    ref = noise_injection_ref(feature_map, noise, linear_w, linear_b, weight)
    assert out.shape == (B, C, H, W)
    assert jnp.allclose(out, ref, atol=1e-5, rtol=1e-5), "mismatch vs reference"

    print("KERNEL_OK")
</pallas_src>

<mosaic_0001>
module attributes {stable_mosaic.version = 11 : i64} {
  func.func @_noise_injection_kernel(%arg0: i32, %arg1: memref<32x1xf32, #tpu.memory_space<vmem>>, %arg2: memref<1x128xf32, #tpu.memory_space<vmem>>, %arg3: memref<32x128xf32, #tpu.memory_space<vmem>>, %arg4: memref<32x128xf32, #tpu.memory_space<vmem>>) attributes {dimension_semantics = [#tpu.dimension_semantics<parallel>], iteration_bounds = array<i64: 1>, scalar_prefetch = 0 : i64, scratch_operands = 0 : i64, tpu.core_type = #tpu.core_type<tc>, window_params = [{transform_indices = @transform_0, window_bounds = array<i64: 32, 1>}, {pipeline_mode = #tpu.pipeline_mode<synchronous>, transform_indices = @transform_1, window_bounds = array<i64: 1, 128>}, {transform_indices = @transform_2, window_bounds = array<i64: 32, 128>}, {transform_indices = @transform_3, window_bounds = array<i64: 32, 128>}]} {
    %c0 = arith.constant 0 : index
    %c0_0 = arith.constant 0 : index
    %0 = vector.load %arg3[%c0, %c0_0] : memref<32x128xf32, #tpu.memory_space<vmem>>, vector<32x128xf32>
    %c0_1 = arith.constant 0 : index
    %c0_2 = arith.constant 0 : index
    %1 = vector.load %arg1[%c0_1, %c0_2] : memref<32x1xf32, #tpu.memory_space<vmem>>, vector<32x1xf32>
    %c0_3 = arith.constant 0 : index
    %c0_4 = arith.constant 0 : index
    %2 = vector.load %arg2[%c0_3, %c0_4] : memref<1x128xf32, #tpu.memory_space<vmem>>, vector<1x128xf32>
    %3 = vector.broadcast %1 : vector<32x1xf32> to vector<32x128xf32>
    %4 = vector.broadcast %2 : vector<1x128xf32> to vector<32x128xf32>
    %5 = arith.mulf %3, %4 : vector<32x128xf32>
    %6 = arith.addf %0, %5 : vector<32x128xf32>
    %c0_5 = arith.constant 0 : index
    %c0_6 = arith.constant 0 : index
    %7 = vector.load %arg4[%c0_5, %c0_6] : memref<32x128xf32, #tpu.memory_space<vmem>>, vector<32x128xf32>
    tpu.vector_store %arg4[%c0_5, %c0_6], %6 {strides = array<i32>} : memref<32x128xf32, #tpu.memory_space<vmem>>, vector<32x128xf32>,
    return
  }
  func.func @transform_0(%arg0: i32) -> (i32, i32) {
    %c0_i32 = arith.constant 0 : i32
    %c0_i32_0 = arith.constant 0 : i32
    return %arg0, %c0_i32 : i32, i32
  }
  func.func @transform_1(%arg0: i32) -> (i32, i32) {
    %c0_i32 = arith.constant 0 : i32
    %c0_i32_0 = arith.constant 0 : i32
    %c0_i32_1 = arith.constant 0 : i32
    return %c0_i32, %c0_i32_0 : i32, i32
  }
  func.func @transform_2(%arg0: i32) -> (i32, i32) {
    %c0_i32 = arith.constant 0 : i32
    %c0_i32_0 = arith.constant 0 : i32
    return %arg0, %c0_i32 : i32, i32
  }
  func.func @transform_3(%arg0: i32) -> (i32, i32) {
    %c0_i32 = arith.constant 0 : i32
    %c0_i32_0 = arith.constant 0 : i32
    return %arg0, %c0_i32 : i32, i32
  }
}

</mosaic_0001>

<llo_original>
// kernel: tpu_custom_call.1
$region0: #{tpu_custom_call.1}
  #allocation0 [shape = 'u32[]', space=smem, size = 0x4, offset = 0x4, fixed_abs, tag = 'smem constant byte address 0x4 - core index']
  #allocation1 [shape = 'u32[144,128]{1,0:T(1,128)}', space=vmem, size = 0x12000, scoped, tag = 'internal scratch']
  %s0 = inlined_call_operand.vmem [shape: f32[32,1], index: 0, kind: input, shape index: {}]
  %s1 = inlined_call_operand.vmem [shape: f32[1,128], index: 1, kind: input, shape index: {}]
  %s2 = inlined_call_operand.vmem [shape: f32[32,128], index: 2, kind: input, shape index: {}]
  %s3 = inlined_call_operand.hbm [shape: f32[32,128], index: 3, kind: output, shape index: {}]
  %s4 = sld [smem:[#allocation0]]
  $region22: #{tpu_custom_call.1} parent=0
    _
  %s6 = ssub.s32 1, %s4
  %s7 = scalar_select 0, %s6, %s4
  $region1: #{tpu_custom_call.1} parent=0
    #allocation2 [shape = 'u8[16384]{0}', space=vmem, size = 0x4000, scoped, tag = 'output window, operand 0, single buffered']
    #allocation3 [shape = 's32[1]{0}', space=sflag, size = 0x4, scoped, tag = 'scoped memory for tpu_custom_call.1']
    %8 = vsyncpa [#allocation3], 0
    // Predicated region
    $region2: #{tpu_custom_call.1} parent=1 // pred_check
      _
    $region3: #{tpu_custom_call.1} parent=1 // pred_check_branch
      %10 = sbr.rel (0) target = $region5
    $region4: #{tpu_custom_call.1} parent=1 // pred_region
      _
    $region5: #{tpu_custom_call.1} parent=1 // pred_fallthru
      _
    // Predicated region
    $region6: #{tpu_custom_call.1} parent=1 // pred_check
      _
    $region7: #{tpu_custom_call.1} parent=1 // pred_check_branch
      %12 = sbr.rel (0) target = $region9
    $region8: #{tpu_custom_call.1} parent=1 // pred_region
      _
    $region9: #{tpu_custom_call.1} parent=1 // pred_fallthru
      _
    // Predicated region
    $region10: #{tpu_custom_call.1} parent=1 // pred_check
      _
    $region11: #{tpu_custom_call.1} parent=1 // pred_check_branch
      %14 = sbr.rel (0) target = $region13
    $region12: #{tpu_custom_call.1} parent=1 // pred_region
      _
    $region13: #{tpu_custom_call.1} parent=1 // pred_fallthru
      _
    %v15 = vld [vmem:[%s2] sm:$0xff]
    %v16 = vld [vmem:[%s2 + $0x8] sm:$0xff]
    %v17 = vld [vmem:[%s2 + $0x10] sm:$0xff]
    %v18 = vld [vmem:[%s2 + $0x18] sm:$0xff]
    %v19 = vld [vmem:[%s0] sm:$0xff]
    %v20 = vld [vmem:[%s0 + $0x8] sm:$0xff]
    %v21 = vld [vmem:[%s0 + $0x10] sm:$0xff]
    %v22 = vld [vmem:[%s0 + $0x18] sm:$0xff]
    %v23 = vld [vmem:[%s1] sm:$0x1]
    %25 = vset.pattern.permute.xlu0 0
    %26 = vperm.xlu0 %25, %v19
    %v27 = vpop.permute.xlu0 %26
    %30 = vset.pattern.permute.xlu0 0
    %31 = vperm.xlu0 %30, %v20
    %v32 = vpop.permute.xlu0 %31
    %35 = vset.pattern.permute.xlu0 0
    %36 = vperm.xlu0 %35, %v21
    %v37 = vpop.permute.xlu0 %36
    %40 = vset.pattern.permute.xlu0 0
    %41 = vperm.xlu0 %40, %v22
    %v42 = vpop.permute.xlu0 %41
    %v45 = vlaneseq
    %v46 = vshrl.u32 %v45, 7
    %v47 = vsub.s32 0, %v46
    %v48 = vrot.slane %v23, %v47
    %v50 = vmul.f32 %v27, %v48
    %v51 = vmul.f32 %v32, %v48
    %v52 = vmul.f32 %v37, %v48
    %v53 = vmul.f32 %v42, %v48
    %v54 = vadd.f32 %v15, %v50
    %v55 = vadd.f32 %v16, %v51
    %v56 = vadd.f32 %v17, %v52
    %v57 = vadd.f32 %v18, %v53
    %58 = vst [vmem:[#allocation2] sm:$0xff] %v54
    %59 = vst [vmem:[#allocation2 + $0x8] sm:$0xff] %v55
    %60 = vst [vmem:[#allocation2 + $0x10] sm:$0xff] %v56
    %61 = vst [vmem:[#allocation2 + $0x18] sm:$0xff] %v57
    // Predicated region
    $region14: #{tpu_custom_call.1} parent=1 // pred_check
      _
    $region15: #{tpu_custom_call.1} parent=1 // pred_check_branch
      %63 = sbr.rel (0) target = $region17
    $region16: #{tpu_custom_call.1} parent=1 // pred_region
      %s65 = ssub.s32 512, 512
      %66 = vsyncadd [#allocation3], %s65
      %s67 = sshll.u32 [#allocation2], 4
      %s68 = int_to_ptr.vmem [resolvable:$true] %s67
      %73 = dma.vmem_to_hbm [thread:$0]  %s68, 512, %s3, [#allocation3], 128, 128, 8
    $region17: #{tpu_custom_call.1} parent=1 // pred_fallthru
      _
    // Predicated region
    $region18: #{tpu_custom_call.1} parent=1 // pred_check
      _
    $region19: #{tpu_custom_call.1} parent=1 // pred_check_branch
      %75 = sbr.rel (0) target = $region21
    $region20: #{tpu_custom_call.1} parent=1 // pred_region
      %76 = dma.done [#allocation3], 512
    $region21: #{tpu_custom_call.1} parent=1 // pred_fallthru
      _
    %77 = vsyncpa [#allocation3], 1

</llo_original>
